<compile_context>
chip_gen: v6e
topology: v6e:2x2x1
jax: 0.10.0
libtpu: 0.0.40
codegen_flags: <defaults>
</compile_context>

<pallas_src>
import functools

import jax
import jax.numpy as jnp
from jax.experimental import pallas as pl
from jax.experimental.pallas import tpu as pltpu

_MASK = -1e30  # finite "minus infinity": exp underflows to 0, no inf/NaN risk


def _fusion_kernel(cav_ref, x_ref, o_ref, *, max_cav, C, inv_sqrt_dim,
                   uniform_cav):
    # cav_ref: SMEM (B,) int32  valid agents per group (agent 0 = ego, always valid)
    # x_ref:   VMEM (max_cav, C, T) input block (agents beyond cav are zero-padded)
    # o_ref:   VMEM (C, T) fused ego-feature block
    if max_cav == 1:
        # softmax over a single entry is identically 1 -> pure copy
        o_ref[...] = x_ref[0]
        return

    x0 = x_ref[0].astype(jnp.float32)                              # (C, T)

    if uniform_cav and max_cav == 2:
        # 2-way softmax == sigmoid(s0 - s1); sigmoid(z) = 0.5*(tanh(z/2)+1)
        # with the 1/2 folded into the score scale -> one EUP tanh.
        x1 = x_ref[1].astype(jnp.float32)
        d = x0 - x1
        zh = jnp.sum(x0 * d, axis=0, keepdims=True) * (0.5 * inv_sqrt_dim)
        a0 = 0.5 * jnp.tanh(zh) + 0.5                              # (1, T)
        o_ref[...] = (x1 + a0 * d).astype(o_ref.dtype)
        return

    cav_b = cav_ref[pl.program_id(0)] if not uniform_cav else max_cav

    # Pass 1: row-0 attention scores. Only x0 + one streamed agent slice live.
    scores = []
    for n in range(max_cav):
        xn = x0 if n == 0 else x_ref[n].astype(jnp.float32)
        s = jnp.sum(x0 * xn, axis=0, keepdims=True) * inv_sqrt_dim  # (1, T)
        if (not uniform_cav) and n > 0:
            s = jnp.where(n < cav_b, s, jnp.float32(_MASK))         # mask padding
        scores.append(s)

    # Numerically stable softmax over the agent axis.
    m = scores[0]
    for s in scores[1:]:
        m = jnp.maximum(m, s)
    es = [jnp.exp(s - m) for s in scores]
    denom = es[0]
    for e in es[1:]:
        denom = denom + e
    # denom in [1, max_cav]: EUP approx reciprocal + one Newton step is safe.
    r = pl.reciprocal(denom, approx=True)
    r = r * (2.0 - denom * r)

    # Pass 2: weighted sum, re-reading agent slices (no cav*(C,T) f32 list).
    out = (es[0] * r) * x0
    for n in range(1, max_cav):
        out = out + (es[n] * r) * x_ref[n].astype(jnp.float32)

    o_ref[...] = out.astype(o_ref.dtype)


def _default_vmem_budget_bytes():
    """~1/4 of physical VMEM, clamped to [16, 32] MiB (v5e/v6e -> 32, v7x -> 16)."""
    cap = 64 << 20
    try:
        cap = int(getattr(pltpu.get_tpu_info(), "vmem_capacity_bytes", cap))
    except Exception:
        pass
    return int(min(32 << 20, max(16 << 20, cap // 4)))


def _pick_tile(HW, max_cav, C, itemsize, budget_bytes):
    """Lane tile (multiple of 128) within the VMEM budget, capped at 2048 so
    large maps get >=2 grid steps (pipelining + v7x megacore sharding)."""
    # Per-lane-column cost: double-buffered in/out blocks + f32 working set.
    per_col = 2 * (max_cav * C + C) * itemsize + 4 * (3 * C + 2 * max_cav + 4)
    cap = (3 * budget_bytes // 4) // max(per_col, 1)   # 25% headroom for scratch
    cap = min(max(cap, 128), 2048)
    cap -= cap % 128
    if HW <= cap:
        return ((HW + 127) // 128) * 128   # small map: a single lane step
    return cap                              # large map: >=2 steps of `cap` lanes


def hpha_transformer_fusion(x, record_len, *, tile=None, vmem_budget_bytes=None):
    """Batched TransformerFusion over all HPHA groups in one pallas_call.

    x:          (sum(record_len), C, H, W) stacked agent features.
    record_len: sequence of Python ints, agents per batch group (ego first).
    Returns:    (B, C, H, W) == stack([TransformerFusion(C)(group_b) for b])."""
    record_len = [int(r) for r in record_len]
    B = len(record_len)
    total, C, H, W = x.shape
    assert sum(record_len) == total and all(r >= 1 for r in record_len)
    max_cav = max(record_len)
    uniform = all(r == max_cav for r in record_len)
    HW = H * W

    itemsize = jnp.dtype(x.dtype).itemsize
    if vmem_budget_bytes is None:
        vmem_budget_bytes = _default_vmem_budget_bytes()
    if tile is None:
        tile = _pick_tile(HW, max_cav, C, itemsize, vmem_budget_bytes)
    assert tile % 128 == 0
    steps = -(-HW // tile)            # cdiv
    HWp = steps * tile

    # Pack groups to (B, max_cav, C, HWp): zero-pad missing agents (masked in
    # the kernel softmax) and the spatial tail (sliced off below).
    xf = x.reshape(total, C, HW)
    groups, off = [], 0
    for r in record_len:
        g = xf[off:off + r]
        if r < max_cav:
            g = jnp.concatenate(
                [g, jnp.zeros((max_cav - r, C, HW), dtype=x.dtype)], axis=0)
        groups.append(g)
        off += r
    xg = jnp.stack(groups, axis=0)                       # (B, max_cav, C, HW)
    if HWp != HW:
        xg = jnp.pad(xg, ((0, 0), (0, 0), (0, 0), (0, HWp - HW)))
    cav_tbl = jnp.asarray(record_len, dtype=jnp.int32)   # SMEM scalar prefetch

    kernel = functools.partial(
        _fusion_kernel, max_cav=max_cav, C=C,
        inv_sqrt_dim=1.0 / float(C) ** 0.5, uniform_cav=uniform)

    cost = pl.CostEstimate(
        flops=int(B * HWp * max_cav * (4 * C + 6)),
        transcendentals=int(B * HWp * max_cav),
        bytes_accessed=int(B * (max_cav + 1) * C * HWp * itemsize))

    out = pl.pallas_call(
        kernel,
        out_shape=jax.ShapeDtypeStruct((B, C, HWp), x.dtype),
        grid_spec=pltpu.PrefetchScalarGridSpec(
            num_scalar_prefetch=1,
            grid=(B, steps),
            in_specs=[pl.BlockSpec((None, max_cav, C, tile),
                                   lambda g, i, cav: (g, 0, 0, i))],
            out_specs=pl.BlockSpec((None, C, tile),
                                   lambda g, i, cav: (g, 0, i)),
        ),
        compiler_params=pltpu.CompilerParams(
            dimension_semantics=("parallel", "parallel"),
            vmem_limit_bytes=int(vmem_budget_bytes)),
        cost_estimate=cost,
    )(cav_tbl, xg)

    if HWp != HW:
        out = out[..., :HW]
    return out.reshape(B, C, H, W)


def transformer_fusion(x, **kw):
    """Single-group convenience wrapper matching TransformerFusion.forward."""
    return hpha_transformer_fusion(x, [x.shape[0]], **kw)[0]


def _reference_group(xg):
    """Pure-JAX reference mirroring the PyTorch forward exactly."""
    cav, C, H, W = xg.shape
    xf = xg.reshape(cav, C, H * W).transpose(2, 0, 1).astype(jnp.float32)
    score = jnp.einsum("pnc,pmc->pnm", xf, xf) / jnp.sqrt(jnp.float32(C))
    attn = jax.nn.softmax(score, axis=-1)
    ctx = jnp.einsum("pnm,pmc->pnc", attn, xf)
    return ctx.transpose(1, 2, 0).reshape(cav, C, H, W)[0].astype(xg.dtype)


def _reference(x, record_len):
    outs, off = [], 0
    for r in record_len:
        outs.append(_reference_group(x[off:off + r]))
        off += r
    return jnp.stack(outs, axis=0)


# TODO(synk): the surrounding HPHA orchestration (backbone blocks, GCN-based
# CollaboratorSelection, SparseMapGenerator top-k / gaussian smoothing,
# ShortTermAttention, EnhanceWeight) depends on external modules and
# data-dependent control flow and is not part of this fusion kernel.

if __name__ == "__main__":
    # Case 1: one HPHA batch with two groups of different cav counts (2 and 3)
    # -> generic masked-softmax path, a single fused pallas_call for the batch.
    C, H, W = 4, 16, 16
    record_len = [2, 3]
    x = jax.random.normal(jax.random.PRNGKey(0),
                          (sum(record_len), C, H, W), dtype=jnp.float32)
    out = jax.block_until_ready(hpha_transformer_fusion(x, record_len))
    ref = _reference(x, record_len)
    assert out.shape == (len(record_len), C, H, W)
    assert jnp.allclose(out, ref, atol=1e-5, rtol=1e-5), "mismatch (mixed cav)"

    # Case 2: uniform cav=2 -> single-EUP sigmoid/tanh softmax path.
    record_len2 = [2, 2]
    x2 = jax.random.normal(jax.random.PRNGKey(1),
                           (sum(record_len2), C, H, W), dtype=jnp.float32)
    out2 = jax.block_until_ready(hpha_transformer_fusion(x2, record_len2))
    ref2 = _reference(x2, record_len2)
    assert jnp.allclose(out2, ref2, atol=1e-5, rtol=1e-5), "mismatch (cav=2)"

    print("KERNEL_OK")
</pallas_src>

<mosaic_0001>
module attributes {stable_mosaic.version = 11 : i64} {
  func.func @_fusion_kernel(%arg0: i32, %arg1: i32, %arg2: memref<2xi32, #tpu.memory_space<smem>>, %arg3: memref<1x3x4x256xf32, #tpu.memory_space<vmem>>, %arg4: memref<1x4x256xf32, #tpu.memory_space<vmem>>) attributes {dimension_semantics = [#tpu.dimension_semantics<parallel>, #tpu.dimension_semantics<parallel>], iteration_bounds = array<i64: 2, 1>, scalar_prefetch = 1 : i64, scratch_operands = 0 : i64, tpu.core_type = #tpu.core_type<tc>, window_params = [{transform_indices = @transform_0, window_bounds = array<i64: 1, 3, 4, 256>}, {transform_indices = @transform_1, window_bounds = array<i64: 1, 4, 256>}]} {
    %c0 = arith.constant 0 : index
    %c0_0 = arith.constant 0 : index
    %c0_1 = arith.constant 0 : index
    %c0_2 = arith.constant 0 : index
    %0 = vector.load %arg3[%c0, %c0_0, %c0_1, %c0_2] : memref<1x3x4x256xf32, #tpu.memory_space<vmem>>, vector<1x1x4x256xf32>
    %1 = vector.shape_cast %0 : vector<1x1x4x256xf32> to vector<4x256xf32>
    %2 = arith.index_cast %arg0 : i32 to index
    %3 = memref.load %arg2[%2] : memref<2xi32, #tpu.memory_space<smem>>
    %4 = arith.mulf %1, %1 : vector<4x256xf32>
    %cst = arith.constant dense<0.000000e+00> : vector<256xf32>
    %5 = vector.multi_reduction <add>, %4, %cst [0] : vector<4x256xf32> to vector<256xf32>
    %6 = vector.shape_cast %5 : vector<256xf32> to vector<1x256xf32>
    %cst_3 = arith.constant 5.000000e-01 : f32
    %7 = vector.broadcast %cst_3 : f32 to vector<1x256xf32>
    %8 = arith.mulf %6, %7 : vector<1x256xf32>
    %c0_4 = arith.constant 0 : index
    %c1 = arith.constant 1 : index
    %c0_5 = arith.constant 0 : index
    %c0_6 = arith.constant 0 : index
    %9 = vector.load %arg3[%c0_4, %c1, %c0_5, %c0_6] : memref<1x3x4x256xf32, #tpu.memory_space<vmem>>, vector<1x1x4x256xf32>
    %10 = vector.shape_cast %9 : vector<1x1x4x256xf32> to vector<4x256xf32>
    %11 = arith.mulf %1, %10 : vector<4x256xf32>
    %cst_7 = arith.constant dense<0.000000e+00> : vector<256xf32>
    %12 = vector.multi_reduction <add>, %11, %cst_7 [0] : vector<4x256xf32> to vector<256xf32>
    %13 = vector.shape_cast %12 : vector<256xf32> to vector<1x256xf32>
    %cst_8 = arith.constant 5.000000e-01 : f32
    %14 = vector.broadcast %cst_8 : f32 to vector<1x256xf32>
    %15 = arith.mulf %13, %14 : vector<1x256xf32>
    %c1_i32 = arith.constant 1 : i32
    %16 = arith.cmpi sgt, %3, %c1_i32 : i32
    %cst_9 = arith.constant -1.000000e+30 : f32
    %17 = vector.broadcast %cst_9 : f32 to vector<1x256xf32>
    %18 = arith.select %16, %15, %17 : vector<1x256xf32>
    %c0_10 = arith.constant 0 : index
    %c2 = arith.constant 2 : index
    %c0_11 = arith.constant 0 : index
    %c0_12 = arith.constant 0 : index
    %19 = vector.load %arg3[%c0_10, %c2, %c0_11, %c0_12] : memref<1x3x4x256xf32, #tpu.memory_space<vmem>>, vector<1x1x4x256xf32>
    %20 = vector.shape_cast %19 : vector<1x1x4x256xf32> to vector<4x256xf32>
    %21 = arith.mulf %1, %20 : vector<4x256xf32>
    %cst_13 = arith.constant dense<0.000000e+00> : vector<256xf32>
    %22 = vector.multi_reduction <add>, %21, %cst_13 [0] : vector<4x256xf32> to vector<256xf32>
    %23 = vector.shape_cast %22 : vector<256xf32> to vector<1x256xf32>
    %cst_14 = arith.constant 5.000000e-01 : f32
    %24 = vector.broadcast %cst_14 : f32 to vector<1x256xf32>
    %25 = arith.mulf %23, %24 : vector<1x256xf32>
    %c2_i32 = arith.constant 2 : i32
    %26 = arith.cmpi sgt, %3, %c2_i32 : i32
    %cst_15 = arith.constant -1.000000e+30 : f32
    %27 = vector.broadcast %cst_15 : f32 to vector<1x256xf32>
    %28 = arith.select %26, %25, %27 : vector<1x256xf32>
    %29 = arith.maximumf %8, %18 : vector<1x256xf32>
    %30 = arith.maximumf %29, %28 : vector<1x256xf32>
    %31 = arith.subf %8, %30 : vector<1x256xf32>
    %32 = math.exp %31 : vector<1x256xf32>
    %33 = arith.subf %18, %30 : vector<1x256xf32>
    %34 = math.exp %33 : vector<1x256xf32>
    %35 = arith.subf %28, %30 : vector<1x256xf32>
    %36 = math.exp %35 : vector<1x256xf32>
    %37 = arith.addf %32, %34 : vector<1x256xf32>
    %38 = arith.addf %37, %36 : vector<1x256xf32>
    %39 = tpu.reciprocal %38 {approx = true} : vector<1x256xf32> -> vector<1x256xf32>
    %40 = arith.mulf %38, %39 : vector<1x256xf32>
    %cst_16 = arith.constant 2.000000e+00 : f32
    %41 = vector.broadcast %cst_16 : f32 to vector<1x256xf32>
    %42 = arith.subf %41, %40 : vector<1x256xf32>
    %43 = arith.mulf %39, %42 : vector<1x256xf32>
    %44 = arith.mulf %32, %43 : vector<1x256xf32>
    %45 = vector.broadcast %44 : vector<1x256xf32> to vector<4x256xf32>
    %46 = arith.mulf %45, %1 : vector<4x256xf32>
    %47 = arith.mulf %34, %43 : vector<1x256xf32>
    %c0_17 = arith.constant 0 : index
    %c1_18 = arith.constant 1 : index
    %c0_19 = arith.constant 0 : index
    %c0_20 = arith.constant 0 : index
    %48 = vector.load %arg3[%c0_17, %c1_18, %c0_19, %c0_20] : memref<1x3x4x256xf32, #tpu.memory_space<vmem>>, vector<1x1x4x256xf32>
    %49 = vector.shape_cast %48 : vector<1x1x4x256xf32> to vector<4x256xf32>
    %50 = vector.broadcast %47 : vector<1x256xf32> to vector<4x256xf32>
    %51 = arith.mulf %50, %49 : vector<4x256xf32>
    %52 = arith.addf %46, %51 : vector<4x256xf32>
    %53 = arith.mulf %36, %43 : vector<1x256xf32>
    %c0_21 = arith.constant 0 : index
    %c2_22 = arith.constant 2 : index
    %c0_23 = arith.constant 0 : index
    %c0_24 = arith.constant 0 : index
    %54 = vector.load %arg3[%c0_21, %c2_22, %c0_23, %c0_24] : memref<1x3x4x256xf32, #tpu.memory_space<vmem>>, vector<1x1x4x256xf32>
    %55 = vector.shape_cast %54 : vector<1x1x4x256xf32> to vector<4x256xf32>
    %56 = vector.broadcast %53 : vector<1x256xf32> to vector<4x256xf32>
    %57 = arith.mulf %56, %55 : vector<4x256xf32>
    %58 = arith.addf %52, %57 : vector<4x256xf32>
    %c0_25 = arith.constant 0 : index
    %c0_26 = arith.constant 0 : index
    %c0_27 = arith.constant 0 : index
    %59 = vector.load %arg4[%c0_25, %c0_26, %c0_27] : memref<1x4x256xf32, #tpu.memory_space<vmem>>, vector<1x4x256xf32>
    %60 = vector.shape_cast %59 : vector<1x4x256xf32> to vector<4x256xf32>
    %61 = vector.shape_cast %58 : vector<4x256xf32> to vector<1x4x256xf32>
    tpu.vector_store %arg4[%c0_25, %c0_26, %c0_27], %61 {strides = array<i32>} : memref<1x4x256xf32, #tpu.memory_space<vmem>>, vector<1x4x256xf32>,
    return
  }
  func.func @transform_0(%arg0: i32, %arg1: i32, %arg2: memref<2xi32, #tpu.memory_space<smem>>) -> (i32, i32, i32, i32) {
    %c0_i32 = arith.constant 0 : i32
    %c0_i32_0 = arith.constant 0 : i32
    %c0_i32_1 = arith.constant 0 : i32
    return %arg0, %c0_i32, %c0_i32_0, %arg1 : i32, i32, i32, i32
  }
  func.func @transform_1(%arg0: i32, %arg1: i32, %arg2: memref<2xi32, #tpu.memory_space<smem>>) -> (i32, i32, i32) {
    %c0_i32 = arith.constant 0 : i32
    %c0_i32_0 = arith.constant 0 : i32
    return %arg0, %c0_i32, %arg1 : i32, i32, i32
  }
}

</mosaic_0001>

<llo_original>
// kernel: tpu_custom_call.1
$region0: #{tpu_custom_call.1}
  #allocation0 [shape = 'u32[]', space=smem, size = 0x4, offset = 0x4, fixed_abs, tag = 'smem constant byte address 0x4 - core index']
  #allocation1 [shape = 'u32[144,128]{1,0:T(1,128)}', space=vmem, size = 0x12000, scoped, tag = 'internal scratch']
  #allocation2 [shape = 's32[1]{0}', space=sflag, size = 0x4, scoped, tag = 'scoped memory for tpu_custom_call.1']
  #allocation3 [shape = 'u8[512]{0}', space=smem, size = 0x200, scoped, tag = 'prefetched SMEM operand 0']
  %s0 = inlined_call_operand.hbm [shape: s32[2], index: 0, kind: input, shape index: {}]
  %s1 = inlined_call_operand.hbm [shape: f32[2,3,4,256], index: 1, kind: input, shape index: {}]
  %s2 = inlined_call_operand.hbm [shape: f32[2,4,256], index: 2, kind: output, shape index: {}]
  %s3 = sld [smem:[#allocation0]]
  $region41: #{tpu_custom_call.1} parent=0
    _
  %s5 = ssub.s32 1, %s3
  %s6 = scalar_select 0, %s5, %s3
  %8 = dma.hbm_to_smem %s0, 16, [#allocation3], [#allocation2]
  %9 = dma.done [#allocation2], 16
  %10 = sfence
  $region1: #{tpu_custom_call.1} parent=0
    #allocation4 [shape = 'u8[24576]{0}', space=vmem, size = 0x6000, scoped, tag = 'input window, operand 1']
    #allocation5 [shape = 's32[2]{0}', space=sflag, size = 0x8, scoped, tag = 'scoped memory for tpu_custom_call.1']
    #allocation6 [shape = 's32[2]{0}', space=sflag, size = 0x8, scoped, tag = 'scoped memory for tpu_custom_call.1']
    #allocation7 [shape = 'u8[8192]{0}', space=vmem, size = 0x2000, scoped, tag = 'output window, operand 0']
    %11 = vsyncpa [#allocation5], 0
    %s12 = scalar_lea.sflag [#allocation5], 1
    %13 = vsyncpa %s12, 0
    %14 = vsyncpa [#allocation6], 0
    %s15 = scalar_lea.sflag [#allocation6], 1
    %16 = vsyncpa %s15, 0
    loop: start=0, step=1, limit=4
    $region2: #{tpu_custom_call.1} parent=1 // loop_pre_header
      _
    $region3: #{tpu_custom_call.1} parent=1 // loop_header
      %s18 = sphi 0, %s22
      %p19 = scmp.ge.s32.totalorder %s18, 4
      %s25 = sphi 0, %s37
      %s26 = sphi 0, %s33
      %s27 = sphi 0, %s25
      %s28 = sphi 0, %s26
      %s29 = sphi 0, %s27
      %s30 = sphi 0, %s28
      %s42 = sphi 0, %s44
      %s45 = sphi 0, %s42
      %s46 = sphi 0, %s45
      %s62 = sphi 0, %s46
      %s70 = sphi 0, %s72
      %s73 = sphi 0, %s70
      %s74 = sphi 0, %s73
      %s90 = sphi 0, %s74
    $region4: #{tpu_custom_call.1} parent=1 // loop_header_branch
      %21 = sbr.rel (%p19) target = $region8
    $region5: #{tpu_custom_call.1} parent=1 // loop_body
      %s23 = ssub.s32 %s18, 1
      %s24 = ssub.s32 %s18, 2
      %s31 = sadd.s32 1, %s26
      %p32 = scmp.ge.s32.totalorder %s31, 1
      %s33 = scalar_select %p32, 0, %s31
      %s34 = sadd.s32 1, %s25
      %s35 = scalar_select %p32, %s34, %s25
      %p36 = scmp.ge.s32.totalorder %s35, 2
      %s37 = scalar_select %p36, 0, %s35
      %s38 = ssub.s32 %s25, %s37
      %s39 = ssub.s32 %s26, %s33
      %s40 = sor.u32 %s38, %s39
      %p41 = scmp.eq.s32.totalorder %s40, 0
      %s43 = sadd.s32 %s42, 1
      %s44 = scalar_select %p41, %s42, %s43
      %p47 = pneg %p41
      %p48 = scmp.eq.s32.totalorder %s18, 1
      %p49 = por %p47, %p48
      %p50 = scmp.ne.s32.totalorder %s42, %s45
      %p51 = scmp.eq.s32.totalorder %s18, 0
      %p52 = por %p50, %p51
      %p53 = scmp.ne.s32.totalorder %s42, %s45
      %p54 = scmp.eq.s32.totalorder %s23, 1
      %p55 = por %p53, %p54
      %p56 = scmp.ne.s32.totalorder %s45, %s46
      %p57 = scmp.eq.s32.totalorder %s23, 0
      %p58 = por %p56, %p57
      %p59 = scmp.ne.s32.totalorder %s45, %s46
      %p60 = scmp.eq.s32.totalorder %s24, 1
      %p61 = por %p59, %p60
      %p63 = scmp.ne.s32.totalorder %s46, %s62
      %p64 = scmp.eq.s32.totalorder %s24, 0
      %p65 = por %p63, %p64
      %s66 = ssub.s32 %s25, %s37
      %s67 = ssub.s32 %s26, %s33
      %s68 = sor.u32 %s66, %s67
      %p69 = scmp.eq.s32.totalorder %s68, 0
      %s71 = sadd.s32 %s70, 1
      %s72 = scalar_select %p69, %s70, %s71
      %p75 = pneg %p69
      %p76 = scmp.eq.s32.totalorder %s18, 1
      %p77 = por %p75, %p76
      %p78 = scmp.ne.s32.totalorder %s70, %s73
      %p79 = scmp.eq.s32.totalorder %s18, 0
      %p80 = por %p78, %p79
      %p81 = scmp.ne.s32.totalorder %s70, %s73
      %p82 = scmp.eq.s32.totalorder %s23, 1
      %p83 = por %p81, %p82
      %p84 = scmp.ne.s32.totalorder %s73, %s74
      %p85 = scmp.eq.s32.totalorder %s23, 0
      %p86 = por %p84, %p85
      %p87 = scmp.ne.s32.totalorder %s73, %s74
      %p88 = scmp.eq.s32.totalorder %s24, 1
      %p89 = por %p87, %p88
      %p91 = scmp.ne.s32.totalorder %s74, %s90
      %p92 = scmp.eq.s32.totalorder %s24, 0
      %p93 = por %p91, %p92
      %p94 = scmp.le.s32.totalorder 1, %s18
      %p95 = scmp.lt.s32.totalorder %s18, 3
      %p96 = pnand %p94, %p95
      %p97 = pneg %p96
      // Predicated region
      $region9: #{tpu_custom_call.1} parent=5 // pred_check
        _
      $region10: #{tpu_custom_call.1} parent=5 // pred_check_branch
        %99 = sbr.rel (%p96) target = $region12
      $region11: #{tpu_custom_call.1} parent=5 // pred_region
        %s100 = ssub.s32 %s18, 1
      $region12: #{tpu_custom_call.1} parent=5 // pred_fallthru
        _
      %p101 = scmp.lt.s32.totalorder %s18, 2
      // Predicated region
      $region13: #{tpu_custom_call.1} parent=5 // pred_check
        %p102 = pneg %p101
      $region14: #{tpu_custom_call.1} parent=5 // pred_check_branch
        %104 = sbr.rel (%p102) target = $region16
      $region15: #{tpu_custom_call.1} parent=5 // pred_region
        // Predicated region
        $region17: #{tpu_custom_call.1} parent=15 // pred_check
          %p105 = pneg %p52
        $region18: #{tpu_custom_call.1} parent=15 // pred_check_branch
          %107 = sbr.rel (%p105) target = $region20
        $region19: #{tpu_custom_call.1} parent=15 // pred_region
          %s108 = sand.u32 %s42, 1
          %s109 = scalar_lea.sflag [#allocation5], %s108
          %s110 = sand.u32 %s42, 1
          %s111 = smul.addr %s110, 24
          %s112 = scalar_lea.vmem [#allocation4], %s111
          %s113 = smul.u32 2, %s26
          %s115 = ssub.s32 384, 384
          %116 = vsyncadd %s109, %s115
          %s117 = smul.addr %s25, 6
          %s118 = sadd.s32 %s113, %s117
          %s119 = smul.addr %s118, 64
          %s120 = scalar_lea.hbm %s1, %s119
          %s121 = sshll.u32 %s112, 4
          %s122 = int_to_ptr.vmem [resolvable:$true] %s121
          %127 = dma.hbm_to_vmem [thread:$0]  %s120, 384, %s122, %s109, 128, 128, 8
        $region20: #{tpu_custom_call.1} parent=15 // pred_fallthru
          _
      $region16: #{tpu_custom_call.1} parent=5 // pred_fallthru
        _
      %p128 = scmp.le.s32.totalorder 1, %s18
      %p129 = scmp.lt.s32.totalorder %s18, 3
      %p130 = pnand %p128, %p129
      %p131 = pneg %p130
      // Predicated region
      $region21: #{tpu_custom_call.1} parent=5 // pred_check
        _
      $region22: #{tpu_custom_call.1} parent=5 // pred_check_branch
        %133 = sbr.rel (%p130) target = $region24
      $region23: #{tpu_custom_call.1} parent=5 // pred_region
        %s134 = ssub.s32 %s18, 1
        %s135 = sand.u32 %s45, 1
        %s136 = scalar_lea.sflag [#allocation5], %s135
        %s137 = sand.u32 %s45, 1
        %s138 = smul.addr %s137, 24
        %s139 = scalar_lea.vmem [#allocation4], %s138
        // Predicated region
        $region25: #{tpu_custom_call.1} parent=23 // pred_check
          %p140 = pneg %p58
        $region26: #{tpu_custom_call.1} parent=23 // pred_check_branch
          %142 = sbr.rel (%p140) target = $region28
        $region27: #{tpu_custom_call.1} parent=23 // pred_region
          %143 = dma.done %s136, 384
        $region28: #{tpu_custom_call.1} parent=23 // pred_fallthru
          _
        %s144 = sand.u32 %s45, 1
        %s145 = scalar_lea.sflag [#allocation5], %s144
        %s146 = sand.u32 %s45, 1
        %s147 = smul.addr %s146, 24
        %s148 = scalar_lea.vmem [#allocation4], %s147
        %p149 = pneg %p58
        %p150 = pneg %p55
        %p151 = pneg %p86
        %p152 = pneg %p83
        %s153 = sand.u32 %s73, 1
        %s154 = scalar_lea.sflag [#allocation6], %s153
        %s155 = sand.u32 %s73, 1
        %s156 = smul.addr %s155, 8
        %s157 = scalar_lea.vmem [#allocation7], %s156
        %s158 = smul.u32 2, %s28
        %s159 = smul.u32 2, %s28
        %v160 = vld [vmem:[%s139] sm:$0xff]
        %s161 = sld [smem:[#allocation3 + %s27]]
        %v162 = vmul.f32 %v160, %v160
        %v164 = vcombine.high %v162, %v162
        %vm166 = vcmask 1043456
        %v167 = vsel %vm166, %v162, 0.0
        %v168 = vrot.slane %v167, 4
        %v169 = vadd.f32 %v167, %v168
        %v170 = vrot.slane %v169, 2
        %v171 = vadd.f32 %v169, %v170
        %v172 = vrot.slane %v171, 1
        %v173 = vadd.f32 %v171, %v172
        %v174 = vsel %vm166, %v164, 0.0
        %v175 = vrot.slane %v174, 4
        %v176 = vadd.f32 %v174, %v175
        %v177 = vrot.slane %v176, 2
        %v178 = vadd.f32 %v176, %v177
        %v179 = vrot.slane %v178, 1
        %v180 = vadd.f32 %v178, %v179
        %v181 = vmul.f32 %v173, 0.5
        %v182 = vmul.f32 %v180, 0.5
        %s183 = scalar_lea.vmem %s139, 8 [#allocation4]
        %v184 = vld [vmem:[%s183] sm:$0xff]
        %v185 = vmul.f32 %v160, %v184
        %v187 = vcombine.high %v185, %v185
        %v189 = vsel %vm166, %v185, 0.0
        %v190 = vrot.slane %v189, 4
        %v191 = vadd.f32 %v189, %v190
        %v192 = vrot.slane %v191, 2
        %v193 = vadd.f32 %v191, %v192
        %v194 = vrot.slane %v193, 1
        %v195 = vadd.f32 %v193, %v194
        %v196 = vsel %vm166, %v187, 0.0
        %v197 = vrot.slane %v196, 4
        %v198 = vadd.f32 %v196, %v197
        %v199 = vrot.slane %v198, 2
        %v200 = vadd.f32 %v198, %v199
        %v201 = vrot.slane %v200, 1
        %v202 = vadd.f32 %v200, %v201
        %v203 = vmul.f32 %v195, 0.5
        %v204 = vmul.f32 %v202, 0.5
        %p205 = scmp.gt.s32.totalorder %s161, 1
        %s206 = scalar_select %p205, 1, 0
        %v207 = vstv %s206
        %vm208 = vcmp.eq.s32.totalorder %v207, 1
        %v209 = vsel %vm208, %v203, -1e+30
        %v210 = vsel %vm208, %v204, -1e+30
        %s211 = scalar_lea.vmem %s139, 16 [#allocation4]
        %v212 = vld [vmem:[%s211] sm:$0xff]
        %v213 = vmul.f32 %v160, %v212
        %v215 = vcombine.high %v213, %v213
        %v217 = vsel %vm166, %v213, 0.0
        %v218 = vrot.slane %v217, 4
        %v219 = vadd.f32 %v217, %v218
        %v220 = vrot.slane %v219, 2
        %v221 = vadd.f32 %v219, %v220
        %v222 = vrot.slane %v221, 1
        %v223 = vadd.f32 %v221, %v222
        %v224 = vsel %vm166, %v215, 0.0
        %v225 = vrot.slane %v224, 4
        %v226 = vadd.f32 %v224, %v225
        %v227 = vrot.slane %v226, 2
        %v228 = vadd.f32 %v226, %v227
        %v229 = vrot.slane %v228, 1
        %v230 = vadd.f32 %v228, %v229
        %v231 = vmul.f32 %v223, 0.5
        %v232 = vmul.f32 %v230, 0.5
        %p233 = scmp.gt.s32.totalorder %s161, 2
        %s234 = scalar_select %p233, 1, 0
        %v235 = vstv %s234
        %vm236 = vcmp.eq.s32.totalorder %v235, 1
        %v237 = vsel %vm236, %v231, -1e+30
        %v238 = vsel %vm236, %v232, -1e+30
        %v239 = vmax.f32 %v181, %v209
        %v240 = vmax.f32 %v182, %v210
        %v241 = vmax.f32 %v239, %v237
        %v242 = vmax.f32 %v240, %v238
        %v243 = vsub.f32 %v181, %v241
        %v244 = vsub.f32 %v182, %v242
        %v245 = vmul.f32 %v243, 1.442695
        %v246 = vpow.pop %v245
        %v247 = vmul.f32 %v244, 1.442695
        %v248 = vpow.pop %v247
        %v249 = vsub.f32 %v209, %v241
        %v250 = vsub.f32 %v210, %v242
        %v251 = vmul.f32 %v249, 1.442695
        %v252 = vpow.pop %v251
        %v253 = vmul.f32 %v250, 1.442695
        %v254 = vpow.pop %v253
        %v255 = vsub.f32 %v237, %v241
        %v256 = vsub.f32 %v238, %v242
        %v257 = vmul.f32 %v255, 1.442695
        %v258 = vpow.pop %v257
        %v259 = vmul.f32 %v256, 1.442695
        %v260 = vpow.pop %v259
        %v261 = vadd.f32 %v246, %v252
        %v262 = vadd.f32 %v248, %v254
        %v263 = vadd.f32 %v261, %v258
        %v264 = vadd.f32 %v262, %v260
        %v265 = vrcp.pop %v263
        %v266 = vrcp.pop %v264
        %v267 = vmul.f32 %v263, %v265
        %v268 = vmul.f32 %v264, %v266
        %v269 = vsub.f32 2.0, %v267
        %v270 = vsub.f32 2.0, %v268
        %v271 = vmul.f32 %v265, %v269
        %v272 = vmul.f32 %v266, %v270
        %v273 = vmul.f32 %v246, %v271
        %v274 = vmul.f32 %v248, %v272
        %v276 = vcombine.high %v160, %v160
        %v278 = vmul.f32 %v273, %v160
        %v279 = vmul.f32 %v274, %v276
        %v280 = vmul.f32 %v252, %v271
        %v281 = vmul.f32 %v254, %v272
        %v283 = vcombine.high %v184, %v184
        %v285 = vmul.f32 %v280, %v184
        %v286 = vmul.f32 %v281, %v283
        %v287 = vadd.f32 %v278, %v285
        %v288 = vadd.f32 %v279, %v286
        %v289 = vmul.f32 %v258, %v271
        %v290 = vmul.f32 %v260, %v272
        %v292 = vcombine.high %v212, %v212
        %v294 = vmul.f32 %v289, %v212
        %v295 = vmul.f32 %v290, %v292
        %v296 = vadd.f32 %v287, %v294
        %v297 = vadd.f32 %v288, %v295
        %v300 = vcombine.low %v296, %v297
        %302 = vst [vmem:[%s157] sm:$0xff] %v300
        %s303 = sand.u32 %s73, 1
        %s304 = scalar_lea.sflag [#allocation6], %s303
        %s305 = sand.u32 %s73, 1
        %s306 = smul.addr %s305, 8
        %s307 = scalar_lea.vmem [#allocation7], %s306
        // Predicated region
        $region29: #{tpu_custom_call.1} parent=23 // pred_check
          %p308 = pneg %p83
        $region30: #{tpu_custom_call.1} parent=23 // pred_check_branch
          %310 = sbr.rel (%p308) target = $region32
        $region31: #{tpu_custom_call.1} parent=23 // pred_region
          %s311 = smul.u32 2, %s28
          %s313 = ssub.s32 128, 128
          %314 = vsyncadd %s304, %s313
          %s315 = smul.addr %s27, 2
          %s316 = sadd.s32 %s311, %s315
          %s317 = smul.addr %s316, 64
          %s318 = scalar_lea.hbm %s2, %s317
          %s320 = sshll.u32 %s307, 4
          %s321 = int_to_ptr.vmem [resolvable:$true] %s320
          %323 = dma.vmem_to_hbm [thread:$0]  %s321, 128, %s318, %s304
        $region32: #{tpu_custom_call.1} parent=23 // pred_fallthru
          _
      $region24: #{tpu_custom_call.1} parent=5 // pred_fallthru
        _
      %p324 = scmp.le.s32.totalorder 2, %s18
      // Predicated region
      $region33: #{tpu_custom_call.1} parent=5 // pred_check
        %p325 = pneg %p324
      $region34: #{tpu_custom_call.1} parent=5 // pred_check_branch
        %327 = sbr.rel (%p325) target = $region36
      $region35: #{tpu_custom_call.1} parent=5 // pred_region
        %s328 = ssub.s32 %s18, 2
        // Predicated region
        $region37: #{tpu_custom_call.1} parent=35 // pred_check
          %p329 = pneg %p89
        $region38: #{tpu_custom_call.1} parent=35 // pred_check_branch
          %331 = sbr.rel (%p329) target = $region40
        $region39: #{tpu_custom_call.1} parent=35 // pred_region
          %s332 = sand.u32 %s74, 1
          %s333 = scalar_lea.sflag [#allocation6], %s332
          %s334 = sand.u32 %s74, 1
          %s335 = smul.addr %s334, 8
          %s336 = scalar_lea.vmem [#allocation7], %s335
          %337 = dma.done %s333, 128
        $region40: #{tpu_custom_call.1} parent=35 // pred_fallthru
          _
      $region36: #{tpu_custom_call.1} parent=5 // pred_fallthru
        _
    $region6: #{tpu_custom_call.1} parent=1 // loop_footer
      %s22 = sadd.s32 1, %s18
    $region7: #{tpu_custom_call.1} parent=1 // loop_footer_branch
      %17 = sbr.rel target = $region3
    $region8: #{tpu_custom_call.1} parent=1 // loop_exit
      _
    %338 = vsyncpa [#allocation5], 1
    %s339 = scalar_lea.sflag [#allocation5], 1
    %340 = vsyncpa %s339, 1
    %341 = vsyncpa [#allocation6], 1
    %s342 = scalar_lea.sflag [#allocation6], 1
    %343 = vsyncpa %s342, 1

</llo_original>
